<compile_context>
chip_gen: v7x
topology: tpu7x:2x2x1
jax: 0.10.0
libtpu: 0.0.40
codegen_flags: <defaults>
</compile_context>

<pallas_src>
import functools

import jax
import jax.numpy as jnp
import numpy as np
from jax.experimental import pallas as pl
from jax.experimental.pallas import tpu as pltpu


# ----------------------------- helpers ---------------------------------------

def _round_up(v, m):
    return ((v + m - 1) // m) * m


def _choose_tiles(num_nodes):
    """Return (Np padded node count, TM dst tile, TN src tile).

    TN is a lane dim of the adjacency tiles -> multiple of 128 (or full array);
    TM is a sublane dim -> multiple of 8.  The (TM, TN, Cp) f32 message temporary
    dominates VMEM, so for large graphs TM=64, TN=128 keeps the per-step working
    set at a few MiB (well under v7x's 64 MiB VMEM).
    """
    if num_nodes <= 128:
        np_ = _round_up(num_nodes, 8)
        return np_, np_, np_
    np_ = _round_up(num_nodes, 128)
    return np_, 64, 128


def _erf_approx(x):
    # Abramowitz & Stegun 7.1.26, |err| <= 1.5e-7 (matches exact erf to f32 eps).
    a1, a2, a3, a4, a5 = 0.254829592, -0.284496736, 1.421413741, -1.453152027, 1.061405429
    p = 0.3275911
    s = jnp.sign(x)
    ax = jnp.abs(x)
    d = 1.0 + p * ax
    # EUP approximate reciprocal + one Newton-Raphson step: divide leaves the
    # VALU-critical path while keeping ~f32 accuracy.
    t = pl.reciprocal(d, approx=True)
    t = t * (2.0 - d * t)
    poly = ((((a5 * t + a4) * t + a3) * t + a2) * t + a1) * t
    return s * (1.0 - poly * jnp.exp(-ax * ax))


def _gelu_exact(x):
    # nn.GELU() default = exact (erf-based) GELU.
    return 0.5 * x * (1.0 + _erf_approx(x * 0.7071067811865476))


# ------------------------------ kernels ---------------------------------------

def _proj_kernel(x_ref, w_ref, pself_ref, pfilm_ref, ph_ref, *, cp, num_rel):
    """One wide MXU matmul producing every FiLM projection at once.

    Column blocks of the fused weight (each cp-lane aligned):
      [h_skip | beta_s | gamma_s | beta_0 gamma_0 ... beta_{R-1} gamma_{R-1} | h_0 ... h_{R-1}]
    Biases are folded in through the ones-lane of x_pad.
    """
    p = jnp.dot(x_ref[...], w_ref[...], preferred_element_type=jnp.float32)
    pself_ref[...] = p[:, :3 * cp]
    for r in range(num_rel):                      # static unroll, R is small
        pfilm_ref[r] = p[:, (3 + 2 * r) * cp:(5 + 2 * r) * cp]
        ph_ref[r] = p[:, (3 + 2 * num_rel + r) * cp:(4 + 2 * num_rel + r) * cp]


def _agg_kernel(nz_ref, pself_ref, pfilm_ref, ph_ref, a_ref, w2_ref, b2_ref,
                out_ref, acc_ref, *, cp):
    """FiLM message passing + mean aggregation + GELU + Linear (fused finalize).

    grid = (dst tile i [parallel], relation r [arbitrary], src tile j [arbitrary]).
    nz_ref: SMEM scalar-prefetch flags, flattened (rel, ni, nj) tile-has-edges map.
    acc_ref: f32 VMEM accumulator for the current destination tile.
    """
    i_id = pl.program_id(0)
    r_id = pl.program_id(1)
    j_id = pl.program_id(2)
    ni = pl.num_programs(0)
    nj = pl.num_programs(2)
    last_r = pl.num_programs(1) - 1
    last_j = nj - 1

    # ---- init: FiLM self/skip branch (once per destination tile) ----
    @pl.when((r_id == 0) & (j_id == 0))
    def _():
        ps = pself_ref[...]
        h_skip = ps[:, 0 * cp:1 * cp]
        beta_s = ps[:, 1 * cp:2 * cp]
        gamma_s = ps[:, 2 * cp:3 * cp]
        acc_ref[...] = jnp.maximum(gamma_s * h_skip + beta_s, 0.0)

    # ---- per (relation, src-tile) FiLM messages, 1/deg-weighted accumulate ----
    # Skip the whole VPU-heavy body for adjacency tiles with no edges (their
    # contribution is exactly zero): big win on sparse graphs / unused relations.
    tile_has_edges = nz_ref[(r_id * ni + i_id) * nj + j_id] != 0

    @pl.when(tile_has_edges)
    def _():
        pf = pfilm_ref[0]                    # [TM, 2*cp]   (dst-tile beta/gamma of rel r)
        beta_r = pf[:, :cp]
        gamma_r = pf[:, cp:]
        h_r = ph_ref[0]                      # [TN, cp]     (src-tile h of rel r)
        a = a_ref[0]                         # [TM, TN]     (already 1/deg normalized)
        # Single fused pass: A-weighting applied inside the reduction, no second
        # [TM, TN, cp] temporary is materialized.
        acc_ref[...] += jnp.sum(
            a[:, :, None]
            * jnp.maximum(gamma_r[:, None, :] * h_r[None, :, :] + beta_r[:, None, :], 0.0),
            axis=1)

    # ---- finalize: GELU -> Linear -> Dropout(identity at inference) ----
    @pl.when((r_id == last_r) & (j_id == last_j))
    def _():
        g = _gelu_exact(acc_ref[...])
        out_ref[...] = (jnp.dot(g, w2_ref[...], preferred_element_type=jnp.float32)
                        + b2_ref[...])


# ------------------------------ JAX-side glue ---------------------------------

def _build_dense_adjacency(edge_index, edge_type, num_nodes, num_relations):
    """A[r, i, j] = (#edges j->i of type r) / deg_r(i); rows with deg 0 stay zero."""
    src = edge_index[0]
    dst = edge_index[1]
    a = jnp.zeros((num_relations, num_nodes, num_nodes), jnp.float32)
    a = a.at[edge_type, dst, src].add(1.0)
    deg = a.sum(axis=2, keepdims=True)
    return jnp.where(deg > 0, a / jnp.where(deg > 0, deg, 1.0), 0.0)


def docee_gnn_forward(x, edge_index, edge_type, params, num_relations):
    n, c = x.shape
    rel = num_relations
    np_, tm, tn = _choose_tiles(n)
    cin_p = _round_up(c + 1, 128)      # +1: ones-lane so biases fold into the matmul
    cout_p = _round_up(c, 128)         # lane-dense feature width used downstream
    f32 = jnp.float32
    nblk = 3 + 3 * rel
    bw = nblk * cout_p

    # ---------------- padded / packed operands (glue) ----------------
    x_pad = (jnp.zeros((np_, cin_p), f32)
             .at[:n, :c].set(x.astype(f32))
             .at[:, c].set(1.0))                                   # bias lane

    def _put(w_all, wt, bias, blk):
        w_all = w_all.at[:c, blk * cout_p: blk * cout_p + c].set(wt.astype(f32))
        if bias is not None:
            w_all = w_all.at[c, blk * cout_p: blk * cout_p + c].set(bias.astype(f32))
        return w_all

    w_all = jnp.zeros((cin_p, bw), f32)
    w_all = _put(w_all, params["W_skip"].T, None, 0)                               # h_skip
    w_all = _put(w_all, params["Wf_skip"][:c].T, params["bf_skip"][:c], 1)         # beta_s
    w_all = _put(w_all, params["Wf_skip"][c:].T, params["bf_skip"][c:], 2)         # gamma_s
    for r in range(rel):
        w_all = _put(w_all, params["W_film"][r][:c].T, params["b_film"][r][:c], 3 + 2 * r)
        w_all = _put(w_all, params["W_film"][r][c:].T, params["b_film"][r][c:], 4 + 2 * r)
        w_all = _put(w_all, params["W_lin"][r].T, None, 3 + 2 * rel + r)           # h_r

    w2_pad = jnp.zeros((cout_p, cout_p), f32).at[:c, :c].set(params["W2"].T)
    b2_pad = jnp.zeros((1, cout_p), f32).at[0, :c].set(params["b2"])

    # Dense, degree-normalized adjacency at padded size (pad rows/cols stay zero).
    # TODO(synk): for sparse graphs replace the dense O(R*N^2) adjacency with a
    # scalar-prefetched CSR/edge-list gather (PrefetchScalarGridSpec) -> O(E*C).
    adj = (jnp.zeros((rel, np_, np_), f32)
           .at[edge_type, edge_index[1], edge_index[0]].add(1.0))
    deg = adj.sum(axis=2, keepdims=True)
    adj = jnp.where(deg > 0, adj / jnp.where(deg > 0, deg, 1.0), 0.0)

    ni = np_ // tm
    nj = np_ // tn

    # Per-(relation, dst-tile, src-tile) "tile has any edge" flags, flattened so the
    # SMEM scalar-prefetch buffer stays tiny (1-D padding rule) and indexed with one
    # scalar multiply-add inside the kernel.
    tile_nz = (adj.reshape(rel, ni, tm, nj, tn).sum(axis=(2, 4)) > 0)
    tile_nz = tile_nz.astype(jnp.int32).reshape(-1)

    # ---------------- kernel 1: fused projections (one wide MXU matmul) ---------
    p_self, p_film, p_h = pl.pallas_call(
        functools.partial(_proj_kernel, cp=cout_p, num_rel=rel),
        grid_spec=pltpu.PrefetchScalarGridSpec(
            num_scalar_prefetch=0,
            grid=(ni,),
            in_specs=[
                pl.BlockSpec((tm, cin_p), lambda i: (i, 0)),
                pl.BlockSpec((cin_p, bw), lambda i: (0, 0)),
            ],
            out_specs=[
                pl.BlockSpec((tm, 3 * cout_p), lambda i: (i, 0)),
                pl.BlockSpec((rel, tm, 2 * cout_p), lambda i: (0, i, 0)),
                pl.BlockSpec((rel, tm, cout_p), lambda i: (0, i, 0)),
            ],
        ),
        out_shape=[
            jax.ShapeDtypeStruct((np_, 3 * cout_p), f32),
            jax.ShapeDtypeStruct((rel, np_, 2 * cout_p), f32),
            jax.ShapeDtypeStruct((rel, np_, cout_p), f32),
        ],
        compiler_params=pltpu.CompilerParams(
            dimension_semantics=("parallel",),
        ),
    )(x_pad, w_all)

    # ---------------- kernel 2: tiled FiLM aggregation + GELU + Linear ----------
    y_pad = pl.pallas_call(
        functools.partial(_agg_kernel, cp=cout_p),
        grid_spec=pltpu.PrefetchScalarGridSpec(
            num_scalar_prefetch=1,
            grid=(ni, rel, nj),
            in_specs=[
                pl.BlockSpec((tm, 3 * cout_p), lambda i, r, j, nz: (i, 0)),      # self/skip
                pl.BlockSpec((1, tm, 2 * cout_p), lambda i, r, j, nz: (r, i, 0)),  # beta/gamma_r
                pl.BlockSpec((1, tn, cout_p), lambda i, r, j, nz: (r, j, 0)),      # h_r (src)
                pl.BlockSpec((1, tm, tn), lambda i, r, j, nz: (r, i, j)),          # A tile
                pl.BlockSpec((cout_p, cout_p), lambda i, r, j, nz: (0, 0)),        # W2
                pl.BlockSpec((1, cout_p), lambda i, r, j, nz: (0, 0)),             # b2
            ],
            out_specs=pl.BlockSpec((tm, cout_p), lambda i, r, j, nz: (i, 0)),
            scratch_shapes=[pltpu.VMEM((tm, cout_p), jnp.float32)],
        ),
        out_shape=jax.ShapeDtypeStruct((np_, cout_p), f32),
        compiler_params=pltpu.CompilerParams(
            # dst-node tiles shard across TensorCores (v7x megacore); the relation
            # and src-tile axes are accumulated and must stay "arbitrary".
            dimension_semantics=("parallel", "arbitrary", "arbitrary"),
            vmem_limit_bytes=48 * 1024 * 1024,
        ),
    )(tile_nz, p_self, p_film, p_h, adj, w2_pad, b2_pad)

    return y_pad[:n, :c]


# --------------------------- pure-JAX reference --------------------------------

def reference_forward(x, edge_index, edge_type, params, num_relations):
    n, c = x.shape
    a = _build_dense_adjacency(edge_index, edge_type, n, num_relations)
    f = x @ params["Wf_skip"].T + params["bf_skip"]
    beta_s, gamma_s = f[:, :c], f[:, c:]
    out = jax.nn.relu(gamma_s * (x @ params["W_skip"].T) + beta_s)
    for r in range(num_relations):
        h = x @ params["W_lin"][r].T
        fr = x @ params["W_film"][r].T + params["b_film"][r]
        beta_r, gamma_r = fr[:, :c], fr[:, c:]
        msg = jax.nn.relu(gamma_r[:, None, :] * h[None, :, :] + beta_r[:, None, :])
        out = out + jnp.einsum("ij,ijc->ic", a[r], msg)
    g = jax.nn.gelu(out, approximate=False)
    return g @ params["W2"].T + params["b2"]


# ----------------------------------- main ---------------------------------------

if __name__ == "__main__":
    node_size = 32      # C
    num_relations = 3   # R
    num_nodes = 16      # N
    num_edges = 40      # E

    key = jax.random.PRNGKey(0)
    ks = jax.random.split(key, 12)
    s = 0.1
    params = {
        # FiLMConv parameters (torch layout [out_features, in_features])
        "W_skip":  s * jax.random.normal(ks[0], (node_size, node_size), jnp.float32),
        "Wf_skip": s * jax.random.normal(ks[1], (2 * node_size, node_size), jnp.float32),
        "bf_skip": s * jax.random.normal(ks[2], (2 * node_size,), jnp.float32),
        "W_lin":   s * jax.random.normal(ks[3], (num_relations, node_size, node_size), jnp.float32),
        "W_film":  s * jax.random.normal(ks[4], (num_relations, 2 * node_size, node_size), jnp.float32),
        "b_film":  s * jax.random.normal(ks[5], (num_relations, 2 * node_size), jnp.float32),
        # linear1 = Sequential(GELU, Linear(C, C), Dropout)
        "W2":      s * jax.random.normal(ks[6], (node_size, node_size), jnp.float32),
        "b2":      s * jax.random.normal(ks[7], (node_size,), jnp.float32),
    }

    x = jax.random.normal(ks[8], (num_nodes, node_size), jnp.float32)
    edge_index = jax.random.randint(ks[9], (2, num_edges), 0, num_nodes, dtype=jnp.int32)
    edge_type = jax.random.randint(ks[10], (num_edges,), 0, num_relations, dtype=jnp.int32)

    out = docee_gnn_forward(x, edge_index, edge_type, params, num_relations)
    out = jax.block_until_ready(out)

    ref = reference_forward(x, edge_index, edge_type, params, num_relations)
    np.testing.assert_allclose(np.asarray(out), np.asarray(ref), rtol=1e-4, atol=1e-4)

    print("KERNEL_OK")
</pallas_src>

<mosaic_0001>
module attributes {stable_mosaic.version = 11 : i64} {
  func.func @_proj_kernel(%arg0: i32, %arg1: memref<16x128xf32, #tpu.memory_space<vmem>>, %arg2: memref<128x1536xf32, #tpu.memory_space<vmem>>, %arg3: memref<16x384xf32, #tpu.memory_space<vmem>>, %arg4: memref<3x16x256xf32, #tpu.memory_space<vmem>>, %arg5: memref<3x16x128xf32, #tpu.memory_space<vmem>>) attributes {dimension_semantics = [#tpu.dimension_semantics<parallel>], iteration_bounds = array<i64: 1>, scalar_prefetch = 0 : i64, scratch_operands = 0 : i64, tpu.core_type = #tpu.core_type<tc>, window_params = [{transform_indices = @transform_0, window_bounds = array<i64: 16, 128>}, {pipeline_mode = #tpu.pipeline_mode<synchronous>, transform_indices = @transform_1, window_bounds = array<i64: 128, 1536>}, {transform_indices = @transform_2, window_bounds = array<i64: 16, 384>}, {transform_indices = @transform_3, window_bounds = array<i64: 3, 16, 256>}, {transform_indices = @transform_4, window_bounds = array<i64: 3, 16, 128>}]} {
    %c0 = arith.constant 0 : index
    %c0_0 = arith.constant 0 : index
    %0 = vector.load %arg1[%c0, %c0_0] : memref<16x128xf32, #tpu.memory_space<vmem>>, vector<16x128xf32>
    %c0_1 = arith.constant 0 : index
    %c0_2 = arith.constant 0 : index
    %1 = vector.load %arg2[%c0_1, %c0_2] : memref<128x1536xf32, #tpu.memory_space<vmem>>, vector<128x1536xf32>
    %cst = arith.constant dense<0.000000e+00> : vector<16x1536xf32>
    %2 = tpu.matmul %0, %1, %cst {dimension_numbers = #tpu.dot_dimension_numbers<[1], [0], [0], [1], [0, 0, 1, 1], [], []>} : vector<16x128xf32>, vector<128x1536xf32>, vector<16x1536xf32> -> vector<16x1536xf32>
    %3 = vector.extract_strided_slice %2 {offsets = [0, 0], sizes = [16, 384], strides = [1, 1]} : vector<16x1536xf32> to vector<16x384xf32>
    %c0_3 = arith.constant 0 : index
    %c0_4 = arith.constant 0 : index
    %4 = vector.load %arg3[%c0_3, %c0_4] : memref<16x384xf32, #tpu.memory_space<vmem>>, vector<16x384xf32>
    tpu.vector_store %arg3[%c0_3, %c0_4], %3 {strides = array<i32>} : memref<16x384xf32, #tpu.memory_space<vmem>>, vector<16x384xf32>,
    %5 = vector.extract_strided_slice %2 {offsets = [0, 384], sizes = [16, 256], strides = [1, 1]} : vector<16x1536xf32> to vector<16x256xf32>
    %c0_5 = arith.constant 0 : index
    %c0_6 = arith.constant 0 : index
    %c0_7 = arith.constant 0 : index
    %6 = vector.load %arg4[%c0_5, %c0_6, %c0_7] : memref<3x16x256xf32, #tpu.memory_space<vmem>>, vector<1x16x256xf32>
    %7 = vector.shape_cast %6 : vector<1x16x256xf32> to vector<16x256xf32>
    %8 = vector.shape_cast %5 : vector<16x256xf32> to vector<1x16x256xf32>
    tpu.vector_store %arg4[%c0_5, %c0_6, %c0_7], %8 {strides = array<i32>} : memref<3x16x256xf32, #tpu.memory_space<vmem>>, vector<1x16x256xf32>,
    %9 = vector.extract_strided_slice %2 {offsets = [0, 1152], sizes = [16, 128], strides = [1, 1]} : vector<16x1536xf32> to vector<16x128xf32>
    %c0_8 = arith.constant 0 : index
    %c0_9 = arith.constant 0 : index
    %c0_10 = arith.constant 0 : index
    %10 = vector.load %arg5[%c0_8, %c0_9, %c0_10] : memref<3x16x128xf32, #tpu.memory_space<vmem>>, vector<1x16x128xf32>
    %11 = vector.shape_cast %10 : vector<1x16x128xf32> to vector<16x128xf32>
    %12 = vector.shape_cast %9 : vector<16x128xf32> to vector<1x16x128xf32>
    tpu.vector_store %arg5[%c0_8, %c0_9, %c0_10], %12 {strides = array<i32>} : memref<3x16x128xf32, #tpu.memory_space<vmem>>, vector<1x16x128xf32>,
    %13 = vector.extract_strided_slice %2 {offsets = [0, 640], sizes = [16, 256], strides = [1, 1]} : vector<16x1536xf32> to vector<16x256xf32>
    %c1 = arith.constant 1 : index
    %c0_11 = arith.constant 0 : index
    %c0_12 = arith.constant 0 : index
    %14 = vector.load %arg4[%c1, %c0_11, %c0_12] : memref<3x16x256xf32, #tpu.memory_space<vmem>>, vector<1x16x256xf32>
    %15 = vector.shape_cast %14 : vector<1x16x256xf32> to vector<16x256xf32>
    %16 = vector.shape_cast %13 : vector<16x256xf32> to vector<1x16x256xf32>
    tpu.vector_store %arg4[%c1, %c0_11, %c0_12], %16 {strides = array<i32>} : memref<3x16x256xf32, #tpu.memory_space<vmem>>, vector<1x16x256xf32>,
    %17 = vector.extract_strided_slice %2 {offsets = [0, 1280], sizes = [16, 128], strides = [1, 1]} : vector<16x1536xf32> to vector<16x128xf32>
    %c1_13 = arith.constant 1 : index
    %c0_14 = arith.constant 0 : index
    %c0_15 = arith.constant 0 : index
    %18 = vector.load %arg5[%c1_13, %c0_14, %c0_15] : memref<3x16x128xf32, #tpu.memory_space<vmem>>, vector<1x16x128xf32>
    %19 = vector.shape_cast %18 : vector<1x16x128xf32> to vector<16x128xf32>
    %20 = vector.shape_cast %17 : vector<16x128xf32> to vector<1x16x128xf32>
    tpu.vector_store %arg5[%c1_13, %c0_14, %c0_15], %20 {strides = array<i32>} : memref<3x16x128xf32, #tpu.memory_space<vmem>>, vector<1x16x128xf32>,
    %21 = vector.extract_strided_slice %2 {offsets = [0, 896], sizes = [16, 256], strides = [1, 1]} : vector<16x1536xf32> to vector<16x256xf32>
    %c2 = arith.constant 2 : index
    %c0_16 = arith.constant 0 : index
    %c0_17 = arith.constant 0 : index
    %22 = vector.load %arg4[%c2, %c0_16, %c0_17] : memref<3x16x256xf32, #tpu.memory_space<vmem>>, vector<1x16x256xf32>
    %23 = vector.shape_cast %22 : vector<1x16x256xf32> to vector<16x256xf32>
    %24 = vector.shape_cast %21 : vector<16x256xf32> to vector<1x16x256xf32>
    tpu.vector_store %arg4[%c2, %c0_16, %c0_17], %24 {strides = array<i32>} : memref<3x16x256xf32, #tpu.memory_space<vmem>>, vector<1x16x256xf32>,
    %25 = vector.extract_strided_slice %2 {offsets = [0, 1408], sizes = [16, 128], strides = [1, 1]} : vector<16x1536xf32> to vector<16x128xf32>
    %c2_18 = arith.constant 2 : index
    %c0_19 = arith.constant 0 : index
    %c0_20 = arith.constant 0 : index
    %26 = vector.load %arg5[%c2_18, %c0_19, %c0_20] : memref<3x16x128xf32, #tpu.memory_space<vmem>>, vector<1x16x128xf32>
    %27 = vector.shape_cast %26 : vector<1x16x128xf32> to vector<16x128xf32>
    %28 = vector.shape_cast %25 : vector<16x128xf32> to vector<1x16x128xf32>
    tpu.vector_store %arg5[%c2_18, %c0_19, %c0_20], %28 {strides = array<i32>} : memref<3x16x128xf32, #tpu.memory_space<vmem>>, vector<1x16x128xf32>,
    return
  }
  func.func @transform_0(%arg0: i32) -> (i32, i32) {
    %c0_i32 = arith.constant 0 : i32
    %c0_i32_0 = arith.constant 0 : i32
    return %arg0, %c0_i32 : i32, i32
  }
  func.func @transform_1(%arg0: i32) -> (i32, i32) {
    %c0_i32 = arith.constant 0 : i32
    %c0_i32_0 = arith.constant 0 : i32
    %c0_i32_1 = arith.constant 0 : i32
    return %c0_i32, %c0_i32_0 : i32, i32
  }
  func.func @transform_2(%arg0: i32) -> (i32, i32) {
    %c0_i32 = arith.constant 0 : i32
    %c0_i32_0 = arith.constant 0 : i32
    return %arg0, %c0_i32 : i32, i32
  }
  func.func @transform_3(%arg0: i32) -> (i32, i32, i32) {
    %c0_i32 = arith.constant 0 : i32
    %c0_i32_0 = arith.constant 0 : i32
    %c0_i32_1 = arith.constant 0 : i32
    return %c0_i32, %arg0, %c0_i32_0 : i32, i32, i32
  }
  func.func @transform_4(%arg0: i32) -> (i32, i32, i32) {
    %c0_i32 = arith.constant 0 : i32
    %c0_i32_0 = arith.constant 0 : i32
    %c0_i32_1 = arith.constant 0 : i32
    return %c0_i32, %arg0, %c0_i32_0 : i32, i32, i32
  }
}

</mosaic_0001>

<llo_original>
// kernel: tpu_custom_call.1
$region0: #{tpu_custom_call.1}
  #allocation0 [shape = 'u32[]', space=smem, size = 0x4, offset = 0x4, fixed_abs, tag = 'smem constant byte address 0x4 - core index']
  #allocation1 [shape = 'u32[144,128]{1,0:T(1,128)}', space=vmem, size = 0x12000, scoped, tag = 'internal scratch']
  %s0 = inlined_call_operand.hbm [shape: f32[16,128], index: 0, kind: input, shape index: {}]
  %s1 = inlined_call_operand.hbm [shape: f32[128,1536], index: 1, kind: input, shape index: {}]
  %s2 = inlined_call_operand.hbm [shape: f32[16,384], index: 2, kind: output, shape index: {0}]
  %s3 = inlined_call_operand.hbm [shape: f32[3,16,256], index: 3, kind: output, shape index: {1}]
  %s4 = inlined_call_operand.hbm [shape: f32[3,16,128], index: 4, kind: output, shape index: {2}]
  %5 = xla_tuple %s2, %s3, %s4
  %s6 = sld [smem:[#allocation0]]
  $region42: #{tpu_custom_call.1} parent=0
    _
  %s8 = ssub.s32 1, %s6
  %s9 = scalar_select 0, %s8, %s6
  $region1: #{tpu_custom_call.1} parent=0
    #allocation2 [shape = 'u8[8192]{0}', space=vmem, size = 0x2000, scoped, tag = 'input window, operand 0, single buffered']
    #allocation3 [shape = 's32[1]{0}', space=sflag, size = 0x4, scoped, tag = 'scoped memory for tpu_custom_call.1']
    #allocation4 [shape = 's32[1]{0}', space=sflag, size = 0x4, scoped, tag = 'scoped memory for tpu_custom_call.1']
    #allocation5 [shape = 'u8[786432]{0}', space=vmem, size = 0xc0000, scoped, tag = 'input window, operand 1, single buffered']
    #allocation6 [shape = 's32[1]{0}', space=sflag, size = 0x4, scoped, tag = 'scoped memory for tpu_custom_call.1']
    #allocation7 [shape = 'u8[24576]{0}', space=vmem, size = 0x6000, scoped, tag = 'output window, operand 0, single buffered']
    #allocation8 [shape = 'u8[49152]{0}', space=vmem, size = 0xc000, scoped, tag = 'output window, operand 1, single buffered']
    #allocation9 [shape = 's32[1]{0}', space=sflag, size = 0x4, scoped, tag = 'scoped memory for tpu_custom_call.1']
    #allocation10 [shape = 'u8[24576]{0}', space=vmem, size = 0x6000, scoped, tag = 'output window, operand 2, single buffered']
    %10 = vsyncpa [#allocation3], 0
    %11 = vsyncpa [#allocation6], 0
    %12 = vsyncpa [#allocation4], 0
    %13 = vsyncpa [#allocation9], 0
    // Predicated region
    $region2: #{tpu_custom_call.1} parent=1 // pred_check
      _
    $region3: #{tpu_custom_call.1} parent=1 // pred_check_branch
      %15 = sbr.rel (0) target = $region5
    $region4: #{tpu_custom_call.1} parent=1 // pred_region
      %s17 = ssub.s32 256, 256
      %18 = vsyncadd [#allocation3], %s17
      %s19 = sshll.u32 [#allocation2], 4
      %s20 = int_to_ptr.vmem [resolvable:$true] %s19
      %25 = dma.hbm_to_vmem [thread:$0]  %s0, 256, %s20, [#allocation3], 128, 128, 8
    $region5: #{tpu_custom_call.1} parent=1 // pred_fallthru
      _
    // Predicated region
    $region6: #{tpu_custom_call.1} parent=1 // pred_check
      _
    $region7: #{tpu_custom_call.1} parent=1 // pred_check_branch
      %27 = sbr.rel (0) target = $region9
    $region8: #{tpu_custom_call.1} parent=1 // pred_region
      %s29 = ssub.s32 24576, 24576
      %30 = vsyncadd [#allocation6], %s29
      %s31 = sshll.u32 [#allocation5], 4
      %s32 = int_to_ptr.vmem [resolvable:$true] %s31
      %37 = dma.hbm_to_vmem [thread:$0]  %s1, 24576, %s32, [#allocation6], 1536, 1536, 96
    $region9: #{tpu_custom_call.1} parent=1 // pred_fallthru
      _
    // Predicated region
    $region10: #{tpu_custom_call.1} parent=1 // pred_check
      _
    $region11: #{tpu_custom_call.1} parent=1 // pred_check_branch
      %39 = sbr.rel (0) target = $region13
    $region12: #{tpu_custom_call.1} parent=1 // pred_region
      %40 = dma.done [#allocation3], 256
    $region13: #{tpu_custom_call.1} parent=1 // pred_fallthru
      _
    // Predicated region
    $region14: #{tpu_custom_call.1} parent=1 // pred_check
      _
    $region15: #{tpu_custom_call.1} parent=1 // pred_check_branch
      %42 = sbr.rel (0) target = $region17
    $region16: #{tpu_custom_call.1} parent=1 // pred_region
      %43 = dma.done [#allocation6], 24576
    $region17: #{tpu_custom_call.1} parent=1 // pred_fallthru
      _
    %v44 = vld [vmem:[#allocation2] sm:$0xff]
    %v45 = vld [vmem:[#allocation2 + $0x8] sm:$0xff]
    %v46 = vld [vmem:[#allocation5] sm:$0xff]
    %v47 = vld [vmem:[#allocation5 + $0x8] sm:$0xff]
    %v48 = vld [vmem:[#allocation5 + $0x10] sm:$0xff]
    %v49 = vld [vmem:[#allocation5 + $0x18] sm:$0xff]
    %v50 = vld [vmem:[#allocation5 + $0x20] sm:$0xff]
    %v51 = vld [vmem:[#allocation5 + $0x28] sm:$0xff]
    %v52 = vld [vmem:[#allocation5 + $0x30] sm:$0xff]
    %v53 = vld [vmem:[#allocation5 + $0x38] sm:$0xff]
    %v54 = vld [vmem:[#allocation5 + $0x40] sm:$0xff]
    %v55 = vld [vmem:[#allocation5 + $0x48] sm:$0xff]
    %v56 = vld [vmem:[#allocation5 + $0x50] sm:$0xff]
    %v57 = vld [vmem:[#allocation5 + $0x58] sm:$0xff]
    %v58 = vld [vmem:[#allocation5 + $0x60] sm:$0xff]
    %v59 = vld [vmem:[#allocation5 + $0x68] sm:$0xff]
    %v60 = vld [vmem:[#allocation5 + $0x70] sm:$0xff]
    %v61 = vld [vmem:[#allocation5 + $0x78] sm:$0xff]
    %v62 = vld [vmem:[#allocation5 + $0x80] sm:$0xff]
    %v63 = vld [vmem:[#allocation5 + $0x88] sm:$0xff]
    %v64 = vld [vmem:[#allocation5 + $0x90] sm:$0xff]
    %v65 = vld [vmem:[#allocation5 + $0x98] sm:$0xff]
    %v66 = vld [vmem:[#allocation5 + $0xa0] sm:$0xff]
    %v67 = vld [vmem:[#allocation5 + $0xa8] sm:$0xff]
    %v68 = vld [vmem:[#allocation5 + $0xb0] sm:$0xff]
    %v69 = vld [vmem:[#allocation5 + $0xb8] sm:$0xff]
    %v70 = vld [vmem:[#allocation5 + $0xc0] sm:$0xff]
    %v71 = vld [vmem:[#allocation5 + $0xc8] sm:$0xff]
    %v72 = vld [vmem:[#allocation5 + $0xd0] sm:$0xff]
    %v73 = vld [vmem:[#allocation5 + $0xd8] sm:$0xff]
    %v74 = vld [vmem:[#allocation5 + $0xe0] sm:$0xff]
    %v75 = vld [vmem:[#allocation5 + $0xe8] sm:$0xff]
    %v76 = vld [vmem:[#allocation5 + $0xf0] sm:$0xff]
    %v77 = vld [vmem:[#allocation5 + $0xf8] sm:$0xff]
    %v78 = vld [vmem:[#allocation5 + $0x100] sm:$0xff]
    %v79 = vld [vmem:[#allocation5 + $0x108] sm:$0xff]
    %v80 = vld [vmem:[#allocation5 + $0x110] sm:$0xff]
    %v81 = vld [vmem:[#allocation5 + $0x118] sm:$0xff]
    %v82 = vld [vmem:[#allocation5 + $0x120] sm:$0xff]
    %v83 = vld [vmem:[#allocation5 + $0x128] sm:$0xff]
    %v84 = vld [vmem:[#allocation5 + $0x130] sm:$0xff]
    %v85 = vld [vmem:[#allocation5 + $0x138] sm:$0xff]
    %v86 = vld [vmem:[#allocation5 + $0x140] sm:$0xff]
    %v87 = vld [vmem:[#allocation5 + $0x148] sm:$0xff]
    %v88 = vld [vmem:[#allocation5 + $0x150] sm:$0xff]
    %v89 = vld [vmem:[#allocation5 + $0x158] sm:$0xff]
    %v90 = vld [vmem:[#allocation5 + $0x160] sm:$0xff]
    %v91 = vld [vmem:[#allocation5 + $0x168] sm:$0xff]
    %v92 = vld [vmem:[#allocation5 + $0x170] sm:$0xff]
    %v93 = vld [vmem:[#allocation5 + $0x178] sm:$0xff]
    %v94 = vld [vmem:[#allocation5 + $0x180] sm:$0xff]
    %v95 = vld [vmem:[#allocation5 + $0x188] sm:$0xff]
    %v96 = vld [vmem:[#allocation5 + $0x190] sm:$0xff]
    %v97 = vld [vmem:[#allocation5 + $0x198] sm:$0xff]
    %v98 = vld [vmem:[#allocation5 + $0x1a0] sm:$0xff]
    %v99 = vld [vmem:[#allocation5 + $0x1a8] sm:$0xff]
    %v100 = vld [vmem:[#allocation5 + $0x1b0] sm:$0xff]
    %v101 = vld [vmem:[#allocation5 + $0x1b8] sm:$0xff]
    %v102 = vld [vmem:[#allocation5 + $0x1c0] sm:$0xff]
    %v103 = vld [vmem:[#allocation5 + $0x1c8] sm:$0xff]
    %v104 = vld [vmem:[#allocation5 + $0x1d0] sm:$0xff]
    %v105 = vld [vmem:[#allocation5 + $0x1d8] sm:$0xff]
    %v106 = vld [vmem:[#allocation5 + $0x1e0] sm:$0xff]
    %v107 = vld [vmem:[#allocation5 + $0x1e8] sm:$0xff]
    %v108 = vld [vmem:[#allocation5 + $0x1f0] sm:$0xff]
    %v109 = vld [vmem:[#allocation5 + $0x1f8] sm:$0xff]
    %v110 = vld [vmem:[#allocation5 + $0x200] sm:$0xff]
    %v111 = vld [vmem:[#allocation5 + $0x208] sm:$0xff]
    %v112 = vld [vmem:[#allocation5 + $0x210] sm:$0xff]
    %v113 = vld [vmem:[#allocation5 + $0x218] sm:$0xff]
    %v114 = vld [vmem:[#allocation5 + $0x220] sm:$0xff]
    %v115 = vld [vmem:[#allocation5 + $0x228] sm:$0xff]
    %v116 = vld [vmem:[#allocation5 + $0x230] sm:$0xff]
    %v117 = vld [vmem:[#allocation5 + $0x238] sm:$0xff]
    %v118 = vld [vmem:[#allocation5 + $0x240] sm:$0xff]
    %v119 = vld [vmem:[#allocation5 + $0x248] sm:$0xff]
    %v120 = vld [vmem:[#allocation5 + $0x250] sm:$0xff]
    %v121 = vld [vmem:[#allocation5 + $0x258] sm:$0xff]
    %v122 = vld [vmem:[#allocation5 + $0x260] sm:$0xff]
    %v123 = vld [vmem:[#allocation5 + $0x268] sm:$0xff]
    %v124 = vld [vmem:[#allocation5 + $0x270] sm:$0xff]
    %v125 = vld [vmem:[#allocation5 + $0x278] sm:$0xff]
    %v126 = vld [vmem:[#allocation5 + $0x280] sm:$0xff]
    %v127 = vld [vmem:[#allocation5 + $0x288] sm:$0xff]
    %v128 = vld [vmem:[#allocation5 + $0x290] sm:$0xff]
    %v129 = vld [vmem:[#allocation5 + $0x298] sm:$0xff]
    %v130 = vld [vmem:[#allocation5 + $0x2a0] sm:$0xff]
    %v131 = vld [vmem:[#allocation5 + $0x2a8] sm:$0xff]
    %v132 = vld [vmem:[#allocation5 + $0x2b0] sm:$0xff]
    %v133 = vld [vmem:[#allocation5 + $0x2b8] sm:$0xff]
    %v134 = vld [vmem:[#allocation5 + $0x2c0] sm:$0xff]
    %v135 = vld [vmem:[#allocation5 + $0x2c8] sm:$0xff]
    %v136 = vld [vmem:[#allocation5 + $0x2d0] sm:$0xff]
    %v137 = vld [vmem:[#allocation5 + $0x2d8] sm:$0xff]
    %v138 = vld [vmem:[#allocation5 + $0x2e0] sm:$0xff]
    %v139 = vld [vmem:[#allocation5 + $0x2e8] sm:$0xff]
    %v140 = vld [vmem:[#allocation5 + $0x2f0] sm:$0xff]
    %v141 = vld [vmem:[#allocation5 + $0x2f8] sm:$0xff]
    %v142 = vld [vmem:[#allocation5 + $0x300] sm:$0xff]
    %v143 = vld [vmem:[#allocation5 + $0x308] sm:$0xff]
    %v144 = vld [vmem:[#allocation5 + $0x310] sm:$0xff]
    %v145 = vld [vmem:[#allocation5 + $0x318] sm:$0xff]
    %v146 = vld [vmem:[#allocation5 + $0x320] sm:$0xff]
    %v147 = vld [vmem:[#allocation5 + $0x328] sm:$0xff]
    %v148 = vld [vmem:[#allocation5 + $0x330] sm:$0xff]
    %v149 = vld [vmem:[#allocation5 + $0x338] sm:$0xff]
    %v150 = vld [vmem:[#allocation5 + $0x340] sm:$0xff]
    %v151 = vld [vmem:[#allocation5 + $0x348] sm:$0xff]
    %v152 = vld [vmem:[#allocation5 + $0x350] sm:$0xff]
    %v153 = vld [vmem:[#allocation5 + $0x358] sm:$0xff]
    %v154 = vld [vmem:[#allocation5 + $0x360] sm:$0xff]
    %v155 = vld [vmem:[#allocation5 + $0x368] sm:$0xff]
    %v156 = vld [vmem:[#allocation5 + $0x370] sm:$0xff]
    %v157 = vld [vmem:[#allocation5 + $0x378] sm:$0xff]
    %v158 = vld [vmem:[#allocation5 + $0x380] sm:$0xff]
    %v159 = vld [vmem:[#allocation5 + $0x388] sm:$0xff]
    %v160 = vld [vmem:[#allocation5 + $0x390] sm:$0xff]
    %v161 = vld [vmem:[#allocation5 + $0x398] sm:$0xff]
    %v162 = vld [vmem:[#allocation5 + $0x3a0] sm:$0xff]
    %v163 = vld [vmem:[#allocation5 + $0x3a8] sm:$0xff]
    %v164 = vld [vmem:[#allocation5 + $0x3b0] sm:$0xff]
    %v165 = vld [vmem:[#allocation5 + $0x3b8] sm:$0xff]
    %v166 = vld [vmem:[#allocation5 + $0x3c0] sm:$0xff]
    %v167 = vld [vmem:[#allocation5 + $0x3c8] sm:$0xff]
    %v168 = vld [vmem:[#allocation5 + $0x3d0] sm:$0xff]
    %v169 = vld [vmem:[#allocation5 + $0x3d8] sm:$0xff]
    %v170 = vld [vmem:[#allocation5 + $0x3e0] sm:$0xff]
    %v171 = vld [vmem:[#allocation5 + $0x3e8] sm:$0xff]
    %v172 = vld [vmem:[#allocation5 + $0x3f0] sm:$0xff]
    %v173 = vld [vmem:[#allocation5 + $0x3f8] sm:$0xff]
    %v174 = vld [vmem:[#allocation5 + $0x400] sm:$0xff]
    %v175 = vld [vmem:[#allocation5 + $0x408] sm:$0xff]
    %v176 = vld [vmem:[#allocation5 + $0x410] sm:$0xff]
    %v177 = vld [vmem:[#allocation5 + $0x418] sm:$0xff]
    %v178 = vld [vmem:[#allocation5 + $0x420] sm:$0xff]
    %v179 = vld [vmem:[#allocation5 + $0x428] sm:$0xff]
    %v180 = vld [vmem:[#allocation5 + $0x430] sm:$0xff]
    %v181 = vld [vmem:[#allocation5 + $0x438] sm:$0xff]
    %v182 = vld [vmem:[#allocation5 + $0x440] sm:$0xff]
    %v183 = vld [vmem:[#allocation5 + $0x448] sm:$0xff]
    %v184 = vld [vmem:[#allocation5 + $0x450] sm:$0xff]
    %v185 = vld [vmem:[#allocation5 + $0x458] sm:$0xff]
    %v186 = vld [vmem:[#allocation5 + $0x460] sm:$0xff]
    %v187 = vld [vmem:[#allocation5 + $0x468] sm:$0xff]
    %v188 = vld [vmem:[#allocation5 + $0x470] sm:$0xff]
    %v189 = vld [vmem:[#allocation5 + $0x478] sm:$0xff]
    %v190 = vld [vmem:[#allocation5 + $0x480] sm:$0xff]
    %v191 = vld [vmem:[#allocation5 + $0x488] sm:$0xff]
    %v192 = vld [vmem:[#allocation5 + $0x490] sm:$0xff]
    %v193 = vld [vmem:[#allocation5 + $0x498] sm:$0xff]
    %v194 = vld [vmem:[#allocation5 + $0x4a0] sm:$0xff]
    %v195 = vld [vmem:[#allocation5 + $0x4a8] sm:$0xff]
    %v196 = vld [vmem:[#allocation5 + $0x4b0] sm:$0xff]
    %v197 = vld [vmem:[#allocation5 + $0x4b8] sm:$0xff]
    %v198 = vld [vmem:[#allocation5 + $0x4c0] sm:$0xff]
    %v199 = vld [vmem:[#allocation5 + $0x4c8] sm:$0xff]
    %v200 = vld [vmem:[#allocation5 + $0x4d0] sm:$0xff]
    %v201 = vld [vmem:[#allocation5 + $0x4d8] sm:$0xff]
    %v202 = vld [vmem:[#allocation5 + $0x4e0] sm:$0xff]
    %v203 = vld [vmem:[#allocation5 + $0x4e8] sm:$0xff]
    %v204 = vld [vmem:[#allocation5 + $0x4f0] sm:$0xff]
    %v205 = vld [vmem:[#allocation5 + $0x4f8] sm:$0xff]
    %v206 = vld [vmem:[#allocation5 + $0x500] sm:$0xff]
    %v207 = vld [vmem:[#allocation5 + $0x508] sm:$0xff]
    %v208 = vld [vmem:[#allocation5 + $0x510] sm:$0xff]
    %v209 = vld [vmem:[#allocation5 + $0x518] sm:$0xff]
    %v210 = vld [vmem:[#allocation5 + $0x520] sm:$0xff]
    %v211 = vld [vmem:[#allocation5 + $0x528] sm:$0xff]
    %v212 = vld [vmem:[#allocation5 + $0x530] sm:$0xff]
    %v213 = vld [vmem:[#allocation5 + $0x538] sm:$0xff]
    %v214 = vld [vmem:[#allocation5 + $0x540] sm:$0xff]
    %v215 = vld [vmem:[#allocation5 + $0x548] sm:$0xff]
    %v216 = vld [vmem:[#allocation5 + $0x550] sm:$0xff]
    %v217 = vld [vmem:[#allocation5 + $0x558] sm:$0xff]
    %v218 = vld [vmem:[#allocation5 + $0x560] sm:$0xff]
    %v219 = vld [vmem:[#allocation5 + $0x568] sm:$0xff]
    %v220 = vld [vmem:[#allocation5 + $0x570] sm:$0xff]
    %v221 = vld [vmem:[#allocation5 + $0x578] sm:$0xff]
    %v222 = vld [vmem:[#allocation5 + $0x580] sm:$0xff]
    %v223 = vld [vmem:[#allocation5 + $0x588] sm:$0xff]
    %v224 = vld [vmem:[#allocation5 + $0x590] sm:$0xff]
    %v225 = vld [vmem:[#allocation5 + $0x598] sm:$0xff]
    %v226 = vld [vmem:[#allocation5 + $0x5a0] sm:$0xff]
    %v227 = vld [vmem:[#allocation5 + $0x5a8] sm:$0xff]
    %v228 = vld [vmem:[#allocation5 + $0x5b0] sm:$0xff]
    %v229 = vld [vmem:[#allocation5 + $0x5b8] sm:$0xff]
    %v230 = vld [vmem:[#allocation5 + $0x5c0] sm:$0xff]
    %v231 = vld [vmem:[#allocation5 + $0x5c8] sm:$0xff]
    %v232 = vld [vmem:[#allocation5 + $0x5d0] sm:$0xff]
    %v233 = vld [vmem:[#allocation5 + $0x5d8] sm:$0xff]
    %v234 = vld [vmem:[#allocation5 + $0x5e0] sm:$0xff]
    %v235 = vld [vmem:[#allocation5 + $0x5e8] sm:$0xff]
    %v236 = vld [vmem:[#allocation5 + $0x5f0] sm:$0xff]
    %v237 = vld [vmem:[#allocation5 + $0x5f8] sm:$0xff]
    %238 = vmatprep.subr.mxu0 %v47
    %239 = vmatpush1.msra.mxu0 %v46
    %240 = vmatprep.subr.mxu0 %v59
    %241 = vmatpush1.msra.mxu0 %v58
    %242 = vmatprep.subr.mxu0 %v71
    %243 = vmatpush1.msra.mxu0 %v70
    %244 = vmatprep.subr.mxu0 %v83
    %245 = vmatpush1.msra.mxu0 %v82
    %246 = vmatprep.subr.mxu0 %v95
    %247 = vmatpush1.msra.mxu0 %v94
    %248 = vmatprep.subr.mxu0 %v107
    %249 = vmatpush1.msra.mxu0 %v106
    %250 = vmatprep.subr.mxu0 %v119
    %251 = vmatpush1.msra.mxu0 %v118
    %252 = vmatprep.subr.mxu0 %v131
    %253 = vmatpush1.msra.mxu0 %v130
    %254 = vmatprep.subr.mxu0 %v143
    %255 = vmatpush1.msra.mxu0 %v142
    %256 = vmatprep.subr.mxu0 %v155
    %257 = vmatpush1.msra.mxu0 %v154
    %258 = vmatprep.subr.mxu0 %v167
    %259 = vmatpush1.msra.mxu0 %v166
    %260 = vmatprep.subr.mxu0 %v179
    %261 = vmatpush1.msra.mxu0 %v178
    %262 = vmatprep.subr.mxu0 %v191
    %263 = vmatpush1.msra.mxu0 %v190
    %264 = vmatprep.subr.mxu0 %v203
    %265 = vmatpush1.msra.mxu0 %v202
    %266 = vmatprep.subr.mxu0 %v215
    %267 = vmatpush1.msra.mxu0 %v214
    %268 = vmatprep.subr.mxu0 %v227
    %269 = vmatpush1.msra.mxu0 %v226
    %270 = vmatprep.subr.mxu0 0.0
    %271 = vmatpush1.msra.mxu0 0.0
    %272 = vmatprep.subr.mxu0 0.0
    %273 = vmatpush1.msra.mxu0 0.0
    %274 = vmatprep.subr.mxu0 0.0
    %275 = vmatpush1.msra.mxu0 0.0
    %276 = vmatprep.subr.mxu0 0.0
    %277 = vmatpush1.msra.mxu0 0.0
    %278 = vmatprep.subr.mxu0 0.0
    %279 = vmatpush1.msra.mxu0 0.0
    %280 = vmatprep.subr.mxu0 0.0
    %281 = vmatpush1.msra.mxu0 0.0
    %282 = vmatprep.subr.mxu0 0.0
    %283 = vmatpush1.msra.mxu0 0.0
    %284 = vmatprep.subr.mxu0 0.0
    %285 = vmatpush1.msra.mxu0 0.0
    %286 = vmatprep.subr.mxu0 0.0
    %287 = vmatpush1.msra.mxu0 0.0
    %288 = vmatprep.subr.mxu0 0.0
    %289 = vmatpush1.msra.mxu0 0.0
    %290 = vmatprep.subr.mxu0 0.0
    %291 = vmatpush1.msra.mxu0 0.0
    %292 = vmatprep.subr.mxu0 0.0
    %293 = vmatpush1.msra.mxu0 0.0
    %294 = vmatprep.subr.mxu0 0.0
    %295 = vmatpush1.msra.mxu0 0.0
    %296 = vmatprep.subr.mxu0 0.0
    %297 = vmatpush1.msra.mxu0 0.0
    %298 = vmatprep.subr.mxu0 0.0
    %299 = vmatpush1.msra.mxu0 0.0
    %300 = vmatprep.subr.mxu0 0.0
    %301 = vmatpush1.msra.mxu0 0.0
    %302 = vmatprep.mubr.f32.mxu0 0.0
    %303 = vmatmul.mubr.f32.gmra.mrb[0].mxu0 %v44
    %v304 = vpop.f32.mrb[0].mxu0
    %v305 = vadd.f32 0.0, %v304
    %v306 = vpop.f32.mrb[0].mxu0
    %v307 = vadd.f32 0.0, %v306
    %308 = vmatprep.mubr.f32.mxu0 0.0
    %309 = vmatmul.mubr.f32.gmra.mrb[0].mxu0 %v45
    %v310 = vpop.f32.mrb[0].mxu0
    %v311 = vadd.f32 0.0, %v310
    %v312 = vpop.f32.mrb[0].mxu0
    %v313 = vadd.f32 0.0, %v312
    %314 = vdwg.mxu0
    %315 = vmatprep.subr.mxu0 %v49
    %316 = vmatpush1.msra.mxu0 %v48
    %317 = vmatprep.subr.mxu0 %v61
    %318 = vmatpush1.msra.mxu0 %v60
    %319 = vmatprep.subr.mxu0 %v73
    %320 = vmatpush1.msra.mxu0 %v72
    %321 = vmatprep.subr.mxu0 %v85
    %322 = vmatpush1.msra.mxu0 %v84
    %323 = vmatprep.subr.mxu0 %v97
    %324 = vmatpush1.msra.mxu0 %v96
    %325 = vmatprep.subr.mxu0 %v109
    %326 = vmatpush1.msra.mxu0 %v108
    %327 = vmatprep.subr.mxu0 %v121
    %328 = vmatpush1.msra.mxu0 %v120
    %329 = vmatprep.subr.mxu0 %v133
    %330 = vmatpush1.msra.mxu0 %v132
    %331 = vmatprep.subr.mxu0 %v145
    %332 = vmatpush1.msra.mxu0 %v144
    %333 = vmatprep.subr.mxu0 %v157
    %334 = vmatpush1.msra.mxu0 %v156
    %335 = vmatprep.subr.mxu0 %v169
    %336 = vmatpush1.msra.mxu0 %v168
    %337 = vmatprep.subr.mxu0 %v181
    %338 = vmatpush1.msra.mxu0 %v180
    %339 = vmatprep.subr.mxu0 %v193
    %340 = vmatpush1.msra.mxu0 %v192
    %341 = vmatprep.subr.mxu0 %v205
    %342 = vmatpush1.msra.mxu0 %v204
    %343 = vmatprep.subr.mxu0 %v217
    %344 = vmatpush1.msra.mxu0 %v216
    %345 = vmatprep.subr.mxu0 %v229
    %346 = vmatpush1.msra.mxu0 %v228
    %347 = vmatprep.subr.mxu0 0.0
    %348 = vmatpush1.msra.mxu0 0.0
    %349 = vmatprep.subr.mxu0 0.0
    %350 = vmatpush1.msra.mxu0 0.0
    %351 = vmatprep.subr.mxu0 0.0
    %352 = vmatpush1.msra.mxu0 0.0
    %353 = vmatprep.subr.mxu0 0.0
    %354 = vmatpush1.msra.mxu0 0.0
    %355 = vmatprep.subr.mxu0 0.0
    %356 = vmatpush1.msra.mxu0 0.0
    %357 = vmatprep.subr.mxu0 0.0
    %358 = vmatpush1.msra.mxu0 0.0
    %359 = vmatprep.subr.mxu0 0.0
    %360 = vmatpush1.msra.mxu0 0.0
    %361 = vmatprep.subr.mxu0 0.0
    %362 = vmatpush1.msra.mxu0 0.0
    %363 = vmatprep.subr.mxu0 0.0
    %364 = vmatpush1.msra.mxu0 0.0
    %365 = vmatprep.subr.mxu0 0.0
    %366 = vmatpush1.msra.mxu0 0.0
    %367 = vmatprep.subr.mxu0 0.0
    %368 = vmatpush1.msra.mxu0 0.0
    %369 = vmatprep.subr.mxu0 0.0
    %370 = vmatpush1.msra.mxu0 0.0
    %371 = vmatprep.subr.mxu0 0.0
    %372 = vmatpush1.msra.mxu0 0.0
    %373 = vmatprep.subr.mxu0 0.0
    %374 = vmatpush1.msra.mxu0 0.0
    %375 = vmatprep.subr.mxu0 0.0
    %376 = vmatpush1.msra.mxu0 0.0
    %377 = vmatprep.subr.mxu0 0.0
    %378 = vmatpush1.msra.mxu0 0.0
    %379 = vmatprep.mubr.f32.mxu0 0.0
    %380 = vmatmul.mubr.f32.gmra.mrb[0].mxu0 %v44
    %v381 = vpop.f32.mrb[0].mxu0
    %v382 = vadd.f32 0.0, %v381
    %v383 = vpop.f32.mrb[0].mxu0
    %v384 = vadd.f32 0.0, %v383
    %385 = vmatprep.mubr.f32.mxu0 0.0
    %386 = vmatmul.mubr.f32.gmra.mrb[0].mxu0 %v45
    %v387 = vpop.f32.mrb[0].mxu0
    %v388 = vadd.f32 0.0, %v387
    %v389 = vpop.f32.mrb[0].mxu0
    %v390 = vadd.f32 0.0, %v389
    %391 = vdwg.mxu0
    %392 = vmatprep.subr.mxu0 %v51
    %393 = vmatpush1.msra.mxu0 %v50
    %394 = vmatprep.subr.mxu0 %v63
    %395 = vmatpush1.msra.mxu0 %v62
    %396 = vmatprep.subr.mxu0 %v75
    %397 = vmatpush1.msra.mxu0 %v74
    %398 = vmatprep.subr.mxu0 %v87
    %399 = vmatpush1.msra.mxu0 %v86
    %400 = vmatprep.subr.mxu0 %v99
    %401 = vmatpush1.msra.mxu0 %v98
    %402 = vmatprep.subr.mxu0 %v111
    %403 = vmatpush1.msra.mxu0 %v110
    %404 = vmatprep.subr.mxu0 %v123
    %405 = vmatpush1.msra.mxu0 %v122
    %406 = vmatprep.subr.mxu0 %v135
    %407 = vmatpush1.msra.mxu0 %v134
    %408 = vmatprep.subr.mxu0 %v147
    %409 = vmatpush1.msra.mxu0 %v146
    %410 = vmatprep.subr.mxu0 %v159
    %411 = vmatpush1.msra.mxu0 %v158
    %412 = vmatprep.subr.mxu0 %v171
    %413 = vmatpush1.msra.mxu0 %v170
    %414 = vmatprep.subr.mxu0 %v183
    %415 = vmatpush1.msra.mxu0 %v182
    %416 = vmatprep.subr.mxu0 %v195
    %417 = vmatpush1.msra.mxu0 %v194
    %418 = vmatprep.subr.mxu0 %v207
    %419 = vmatpush1.msra.mxu0 %v206
    %420 = vmatprep.subr.mxu0 %v219
    %421 = vmatpush1.msra.mxu0 %v218
    %422 = vmatprep.subr.mxu0 %v231
    %423 = vmatpush1.msra.mxu0 %v230
    %424 = vmatprep.subr.mxu0 0.0
    %425 = vmatpush1.msra.mxu0 0.0
    %426 = vmatprep.subr.mxu0 0.0
    %427 = vmatpush1.msra.mxu0 0.0
    %428 = vmatprep.subr.mxu0 0.0
    %429 = vmatpush1.msra.mxu0 0.0
    %430 = vmatprep.subr.mxu0 0.0
    %431 = vmatpush1.msra.mxu0 0.0
    %432 = vmatprep.subr.mxu0 0.0
    %433 = vmatpush1.msra.mxu0 0.0
    %434 = vmatprep.subr.mxu0 0.0
    %435 = vmatpush1.msra.mxu0 0.0
    %436 = vmatprep.subr.mxu0 0.0
    %437 = vmatpush1.msra.mxu0 0.0
    %438 = vmatprep.subr.mxu0 0.0
    %439 = vmatpush1.msra.mxu0 0.0
    %440 = vmatprep.subr.mxu0 0.0
    %441 = vmatpush1.msra.mxu0 0.0
    %442 = vmatprep.subr.mxu0 0.0
    %443 = vmatpush1.msra.mxu0 0.0
    %444 = vmatprep.subr.mxu0 0.0
    %445 = vmatpush1.msra.mxu0 0.0
    %446 = vmatprep.subr.mxu0 0.0
    %447 = vmatpush1.msra.mxu0 0.0
    %448 = vmatprep.subr.mxu0 0.0
    %449 = vmatpush1.msra.mxu0 0.0
    %450 = vmatprep.subr.mxu0 0.0
    %451 = vmatpush1.msra.mxu0 0.0
    %452 = vmatprep.subr.mxu0 0.0
    %453 = vmatpush1.msra.mxu0 0.0
    %454 = vmatprep.subr.mxu0 0.0
    %455 = vmatpush1.msra.mxu0 0.0
    %456 = vmatprep.mubr.f32.mxu0 0.0
    %457 = vmatmul.mubr.f32.gmra.mrb[0].mxu0 %v44
    %v458 = vpop.f32.mrb[0].mxu0
    %v459 = vadd.f32 0.0, %v458
    %v460 = vpop.f32.mrb[0].mxu0
    %v461 = vadd.f32 0.0, %v460
    %462 = vmatprep.mubr.f32.mxu0 0.0
    %463 = vmatmul.mubr.f32.gmra.mrb[0].mxu0 %v45
    %v464 = vpop.f32.mrb[0].mxu0
    %v465 = vadd.f32 0.0, %v464
    %v466 = vpop.f32.mrb[0].mxu0
    %v467 = vadd.f32 0.0, %v466
    %468 = vdwg.mxu0
    %469 = vmatprep.subr.mxu0 %v53
    %470 = vmatpush1.msra.mxu0 %v52
    %471 = vmatprep.subr.mxu0 %v65
    %472 = vmatpush1.msra.mxu0 %v64
    %473 = vmatprep.subr.mxu0 %v77
    %474 = vmatpush1.msra.mxu0 %v76
    %475 = vmatprep.subr.mxu0 %v89
    %476 = vmatpush1.msra.mxu0 %v88
    %477 = vmatprep.subr.mxu0 %v101
    %478 = vmatpush1.msra.mxu0 %v100
    %479 = vmatprep.subr.mxu0 %v113
    %480 = vmatpush1.msra.mxu0 %v112
    %481 = vmatprep.subr.mxu0 %v125
    %482 = vmatpush1.msra.mxu0 %v124
    %483 = vmatprep.subr.mxu0 %v137
    %484 = vmatpush1.msra.mxu0 %v136
    %485 = vmatprep.subr.mxu0 %v149
    %486 = vmatpush1.msra.mxu0 %v148
    %487 = vmatprep.subr.mxu0 %v161
    %488 = vmatpush1.msra.mxu0 %v160
    %489 = vmatprep.subr.mxu0 %v173
    %490 = vmatpush1.msra.mxu0 %v172
    %491 = vmatprep.subr.mxu0 %v185
    %492 = vmatpush1.msra.mxu0 %v184
    %493 = vmatprep.subr.mxu0 %v197
    %494 = vmatpush1.msra.mxu0 %v196
    %495 = vmatprep.subr.mxu0 %v209
    %496 = vmatpush1.msra.mxu0 %v208
    %497 = vmatprep.subr.mxu0 %v221
    %498 = vmatpush1.msra.mxu0 %v220
    %499 = vmatprep.subr.mxu0 %v233
    %500 = vmatpush1.msra.mxu0 %v232
    %501 = vmatprep.subr.mxu0 0.0
    %502 = vmatpush1.msra.mxu0 0.0
    %503 = vmatprep.subr.mxu0 0.0
    %504 = vmatpush1.msra.mxu0 0.0
    %505 = vmatprep.subr.mxu0 0.0
    %506 = vmatpush1.msra.mxu0 0.0
    %507 = vmatprep.subr.mxu0 0.0
    %508 = vmatpush1.msra.mxu0 0.0
    %509 = vmatprep.subr.mxu0 0.0
    %510 = vmatpush1.msra.mxu0 0.0
    %511 = vmatprep.subr.mxu0 0.0
    %512 = vmatpush1.msra.mxu0 0.0
    %513 = vmatprep.subr.mxu0 0.0
    %514 = vmatpush1.msra.mxu0 0.0
    %515 = vmatprep.subr.mxu0 0.0
    %516 = vmatpush1.msra.mxu0 0.0
    %517 = vmatprep.subr.mxu0 0.0
    %518 = vmatpush1.msra.mxu0 0.0
    %519 = vmatprep.subr.mxu0 0.0
    %520 = vmatpush1.msra.mxu0 0.0
    %521 = vmatprep.subr.mxu0 0.0
    %522 = vmatpush1.msra.mxu0 0.0
    %523 = vmatprep.subr.mxu0 0.0
    %524 = vmatpush1.msra.mxu0 0.0
    %525 = vmatprep.subr.mxu0 0.0
    %526 = vmatpush1.msra.mxu0 0.0
    %527 = vmatprep.subr.mxu0 0.0
    %528 = vmatpush1.msra.mxu0 0.0
    %529 = vmatprep.subr.mxu0 0.0
    %530 = vmatpush1.msra.mxu0 0.0
    %531 = vmatprep.subr.mxu0 0.0
    %532 = vmatpush1.msra.mxu0 0.0
    %533 = vmatprep.mubr.f32.mxu0 0.0
    %534 = vmatmul.mubr.f32.gmra.mrb[0].mxu0 %v44
    %v535 = vpop.f32.mrb[0].mxu0
    %v536 = vadd.f32 0.0, %v535
    %v537 = vpop.f32.mrb[0].mxu0
    %v538 = vadd.f32 0.0, %v537
    %539 = vmatprep.mubr.f32.mxu0 0.0
    %540 = vmatmul.mubr.f32.gmra.mrb[0].mxu0 %v45
    %v541 = vpop.f32.mrb[0].mxu0
    %v542 = vadd.f32 0.0, %v541
    %v543 = vpop.f32.mrb[0].mxu0
    %v544 = vadd.f32 0.0, %v543
    %545 = vdwg.mxu0
    %546 = vmatprep.subr.mxu0 %v55
    %547 = vmatpush1.msra.mxu0 %v54
    %548 = vmatprep.subr.mxu0 %v67
    %549 = vmatpush1.msra.mxu0 %v66
    %550 = vmatprep.subr.mxu0 %v79
    %551 = vmatpush1.msra.mxu0 %v78
    %552 = vmatprep.subr.mxu0 %v91
    %553 = vmatpush1.msra.mxu0 %v90
    %554 = vmatprep.subr.mxu0 %v103
    %555 = vmatpush1.msra.mxu0 %v102
    %556 = vmatprep.subr.mxu0 %v115
    %557 = vmatpush1.msra.mxu0 %v114
    %558 = vmatprep.subr.mxu0 %v127
    %559 = vmatpush1.msra.mxu0 %v126
    %560 = vmatprep.subr.mxu0 %v139
    %561 = vmatpush1.msra.mxu0 %v138
    %562 = vmatprep.subr.mxu0 %v151
    %563 = vmatpush1.msra.mxu0 %v150
    %564 = vmatprep.subr.mxu0 %v163
    %565 = vmatpush1.msra.mxu0 %v162
    %566 = vmatprep.subr.mxu0 %v175
    %567 = vmatpush1.msra.mxu0 %v174
    %568 = vmatprep.subr.mxu0 %v187
    %569 = vmatpush1.msra.mxu0 %v186
    %570 = vmatprep.subr.mxu0 %v199
    %571 = vmatpush1.msra.mxu0 %v198
    %572 = vmatprep.subr.mxu0 %v211
    %573 = vmatpush1.msra.mxu0 %v210
    %574 = vmatprep.subr.mxu0 %v223
    %575 = vmatpush1.msra.mxu0 %v222
    %576 = vmatprep.subr.mxu0 %v235
    %577 = vmatpush1.msra.mxu0 %v234
    %578 = vmatprep.subr.mxu0 0.0
    %579 = vmatpush1.msra.mxu0 0.0
    %580 = vmatprep.subr.mxu0 0.0
    %581 = vmatpush1.msra.mxu0 0.0
    %582 = vmatprep.subr.mxu0 0.0
    %583 = vmatpush1.msra.mxu0 0.0
    %584 = vmatprep.subr.mxu0 0.0
    %585 = vmatpush1.msra.mxu0 0.0
    %586 = vmatprep.subr.mxu0 0.0
    %587 = vmatpush1.msra.mxu0 0.0
    %588 = vmatprep.subr.mxu0 0.0
    %589 = vmatpush1.msra.mxu0 0.0
    %590 = vmatprep.subr.mxu0 0.0
    %591 = vmatpush1.msra.mxu0 0.0
    %592 = vmatprep.subr.mxu0 0.0
    %593 = vmatpush1.msra.mxu0 0.0
    %594 = vmatprep.subr.mxu0 0.0
    %595 = vmatpush1.msra.mxu0 0.0
    %596 = vmatprep.subr.mxu0 0.0
    %597 = vmatpush1.msra.mxu0 0.0
    %598 = vmatprep.subr.mxu0 0.0
    %599 = vmatpush1.msra.mxu0 0.0
    %600 = vmatprep.subr.mxu0 0.0
    %601 = vmatpush1.msra.mxu0 0.0
    %602 = vmatprep.subr.mxu0 0.0
    %603 = vmatpush1.msra.mxu0 0.0
    %604 = vmatprep.subr.mxu0 0.0
    %605 = vmatpush1.msra.mxu0 0.0
    %606 = vmatprep.subr.mxu0 0.0
    %607 = vmatpush1.msra.mxu0 0.0
    %608 = vmatprep.subr.mxu0 0.0
    %609 = vmatpush1.msra.mxu0 0.0
    %610 = vmatprep.mubr.f32.mxu0 0.0
    %611 = vmatmul.mubr.f32.gmra.mrb[0].mxu0 %v44
    %v612 = vpop.f32.mrb[0].mxu0
    %v613 = vadd.f32 0.0, %v612
    %v614 = vpop.f32.mrb[0].mxu0
    %v615 = vadd.f32 0.0, %v614
    %616 = vmatprep.mubr.f32.mxu0 0.0
    %617 = vmatmul.mubr.f32.gmra.mrb[0].mxu0 %v45
    %v618 = vpop.f32.mrb[0].mxu0
    %v619 = vadd.f32 0.0, %v618
    %v620 = vpop.f32.mrb[0].mxu0
    %v621 = vadd.f32 0.0, %v620
    %622 = vdwg.mxu0
    %623 = vmatprep.subr.mxu0 %v57
    %624 = vmatpush1.msra.mxu0 %v56
    %625 = vmatprep.subr.mxu0 %v69
    %626 = vmatpush1.msra.mxu0 %v68
    %627 = vmatprep.subr.mxu0 %v81
    %628 = vmatpush1.msra.mxu0 %v80
    %629 = vmatprep.subr.mxu0 %v93
    %630 = vmatpush1.msra.mxu0 %v92
    %631 = vmatprep.subr.mxu0 %v105
    %632 = vmatpush1.msra.mxu0 %v104
    %633 = vmatprep.subr.mxu0 %v117
    %634 = vmatpush1.msra.mxu0 %v116
    %635 = vmatprep.subr.mxu0 %v129
    %636 = vmatpush1.msra.mxu0 %v128
    %637 = vmatprep.subr.mxu0 %v141
    %638 = vmatpush1.msra.mxu0 %v140
    %639 = vmatprep.subr.mxu0 %v153
    %640 = vmatpush1.msra.mxu0 %v152
    %641 = vmatprep.subr.mxu0 %v165
    %642 = vmatpush1.msra.mxu0 %v164
    %643 = vmatprep.subr.mxu0 %v177
    %644 = vmatpush1.msra.mxu0 %v176
    %645 = vmatprep.subr.mxu0 %v189
    %646 = vmatpush1.msra.mxu0 %v188
    %647 = vmatprep.subr.mxu0 %v201
    %648 = vmatpush1.msra.mxu0 %v200
    %649 = vmatprep.subr.mxu0 %v213
    %650 = vmatpush1.msra.mxu0 %v212
    %651 = vmatprep.subr.mxu0 %v225
    %652 = vmatpush1.msra.mxu0 %v224
    %653 = vmatprep.subr.mxu0 %v237
    %654 = vmatpush1.msra.mxu0 %v236
    %655 = vmatprep.subr.mxu0 0.0
    %656 = vmatpush1.msra.mxu0 0.0
    %657 = vmatprep.subr.mxu0 0.0
    %658 = vmatpush1.msra.mxu0 0.0
    %659 = vmatprep.subr.mxu0 0.0
    %660 = vmatpush1.msra.mxu0 0.0
    %661 = vmatprep.subr.mxu0 0.0
    %662 = vmatpush1.msra.mxu0 0.0
    %663 = vmatprep.subr.mxu0 0.0
    %664 = vmatpush1.msra.mxu0 0.0
    %665 = vmatprep.subr.mxu0 0.0
    %666 = vmatpush1.msra.mxu0 0.0
    %667 = vmatprep.subr.mxu0 0.0
    %668 = vmatpush1.msra.mxu0 0.0
    %669 = vmatprep.subr.mxu0 0.0
    %670 = vmatpush1.msra.mxu0 0.0
    %671 = vmatprep.subr.mxu0 0.0
    %672 = vmatpush1.msra.mxu0 0.0
    %673 = vmatprep.subr.mxu0 0.0
    %674 = vmatpush1.msra.mxu0 0.0
    %675 = vmatprep.subr.mxu0 0.0
    %676 = vmatpush1.msra.mxu0 0.0
    %677 = vmatprep.subr.mxu0 0.0
    %678 = vmatpush1.msra.mxu0 0.0
    %679 = vmatprep.subr.mxu0 0.0
    %680 = vmatpush1.msra.mxu0 0.0
    %681 = vmatprep.subr.mxu0 0.0
    %682 = vmatpush1.msra.mxu0 0.0
    %683 = vmatprep.subr.mxu0 0.0
    %684 = vmatpush1.msra.mxu0 0.0
    %685 = vmatprep.subr.mxu0 0.0
    %686 = vmatpush1.msra.mxu0 0.0
    %687 = vmatprep.mubr.f32.mxu0 0.0
    %688 = vmatmul.mubr.f32.gmra.mrb[0].mxu0 %v44
    %v689 = vpop.f32.mrb[0].mxu0
    %v690 = vadd.f32 0.0, %v689
    %v691 = vpop.f32.mrb[0].mxu0
    %v692 = vadd.f32 0.0, %v691
    %693 = vmatprep.mubr.f32.mxu0 0.0
    %694 = vmatmul.mubr.f32.gmra.mrb[0].mxu0 %v45
    %v695 = vpop.f32.mrb[0].mxu0
    %v696 = vadd.f32 0.0, %v695
    %v697 = vpop.f32.mrb[0].mxu0
    %v698 = vadd.f32 0.0, %v697
    %699 = vdwg.mxu0
    %700 = vst [vmem:[#allocation7] sm:$0xff] %v305
    %701 = vst [vmem:[#allocation7 + $0x8] sm:$0xff] %v307
    %702 = vst [vmem:[#allocation7 + $0x10] sm:$0xff] %v382
    %703 = vst [vmem:[#allocation7 + $0x18] sm:$0xff] %v311
    %704 = vst [vmem:[#allocation7 + $0x20] sm:$0xff] %v313
    %705 = vst [vmem:[#allocation7 + $0x28] sm:$0xff] %v388
    %706 = vst [vmem:[#allocation8] sm:$0xff] %v384
    %707 = vst [vmem:[#allocation8 + $0x8] sm:$0xff] %v459
    %708 = vst [vmem:[#allocation8 + $0x10] sm:$0xff] %v390
    %709 = vst [vmem:[#allocation8 + $0x18] sm:$0xff] %v465
    %710 = vst [vmem:[#allocation10] sm:$0xff] %v615
    %711 = vst [vmem:[#allocation10 + $0x8] sm:$0xff] %v621
    %s712 = scalar_lea.vmem [#allocation8], 32
    %713 = vst [vmem:[%s712] sm:$0xff] %v461
    %714 = vst [vmem:[%s712 + $0x8] sm:$0xff] %v536
    %715 = vst [vmem:[%s712 + $0x10] sm:$0xff] %v467
    %716 = vst [vmem:[%s712 + $0x18] sm:$0xff] %v542
    %s717 = scalar_lea.vmem [#allocation10], 16
    %718 = vst [vmem:[%s717] sm:$0xff] %v690
    %719 = vst [vmem:[%s717 + $0x8] sm:$0xff] %v696
    %s720 = scalar_lea.vmem [#allocation8], 64
    %721 = vst [vmem:[%s720] sm:$0xff] %v538
    %722 = vst [vmem:[%s720 + $0x8] sm:$0xff] %v613
    %723 = vst [vmem:[%s720 + $0x10] sm:$0xff] %v544
    %724 = vst [vmem:[%s720 + $0x18] sm:$0xff] %v619
    %s725 = scalar_lea.vmem [#allocation10], 32
    %726 = vst [vmem:[%s725] sm:$0xff] %v692
    %727 = vst [vmem:[%s725 + $0x8] sm:$0xff] %v698
    // Predicated region
    $region18: #{tpu_custom_call.1} parent=1 // pred_check
      _
    $region19: #{tpu_custom_call.1} parent=1 // pred_check_branch
      %729 = sbr.rel (0) target = $region21
    $region20: #{tpu_custom_call.1} parent=1 // pred_region
      %s731 = ssub.s32 768, 768
      %732 = vsyncadd [#allocation4], %s731
      %s733 = sshll.u32 [#allocation7], 4
      %s734 = int_to_ptr.vmem [resolvable:$true] %s733
      %739 = dma.vmem_to_hbm [thread:$0]  %s734, 768, %s2, [#allocation4], 384, 384, 24
    $region21: #{tpu_custom_call.1} parent=1 // pred_fallthru
      _
    // Predicated region
    $region22: #{tpu_custom_call.1} parent=1 // pred_check
      _
    $region23: #{tpu_custom_call.1} parent=1 // pred_check_branch
      %741 = sbr.rel (0) target = $region25
    $region24: #{tpu_custom_call.1} parent=1 // pred_region
      %s743 = ssub.s32 1536, 1536
      %744 = vsyncadd [#allocation9], %s743
      %s745 = sshll.u32 [#allocation8], 4
      %s746 = int_to_ptr.vmem [resolvable:$true] %s745
      %751 = dma.vmem_to_hbm [thread:$0]  %s746, 1536, %s3, [#allocation9], 256, 256, 16
    $region25: #{tpu_custom_call.1} parent=1 // pred_fallthru
      _
    // Predicated region
    $region26: #{tpu_custom_call.1} parent=1 // pred_check
      _
    $region27: #{tpu_custom_call.1} parent=1 // pred_check_branch
      %753 = sbr.rel (0) target = $region29
    $region28: #{tpu_custom_call.1} parent=1 // pred_region
      %s755 = ssub.s32 768, 768
      %756 = vsyncadd [#allocation9], %s755
      %s757 = sshll.u32 [#allocation10], 4
      %s758 = int_to_ptr.vmem [resolvable:$true] %s757
      %763 = dma.vmem_to_hbm [thread:$0]  %s758, 768, %s4, [#allocation9], 128, 128, 8
    $region29: #{tpu_custom_call.1} parent=1 // pred_fallthru
      _
    // Predicated region
    $region30: #{tpu_custom_call.1} parent=1 // pred_check
      _
    $region31: #{tpu_custom_call.1} parent=1 // pred_check_branch
      %765 = sbr.rel (0) target = $region33
    $region32: #{tpu_custom_call.1} parent=1 // pred_region
      %766 = dma.done [#allocation4], 768
    $region33: #{tpu_custom_call.1} parent=1 // pred_fallthru
      _
    // Predicated region
    $region34: #{tpu_custom_call.1} parent=1 // pred_check
      _
    $region35: #{tpu_custom_call.1} parent=1 // pred_check_branch
      %768 = sbr.rel (0) target = $region37
    $region36: #{tpu_custom_call.1} parent=1 // pred_region
      %769 = dma.done [#allocation9], 1536
    $region37: #{tpu_custom_call.1} parent=1 // pred_fallthru
      _
    // Predicated region
    $region38: #{tpu_custom_call.1} parent=1 // pred_check
      _
    $region39: #{tpu_custom_call.1} parent=1 // pred_check_branch
      %771 = sbr.rel (0) target = $region41
    $region40: #{tpu_custom_call.1} parent=1 // pred_region
      %772 = dma.done [#allocation9], 768
    $region41: #{tpu_custom_call.1} parent=1 // pred_fallthru
      _
    %773 = vsyncpa [#allocation3], 1
    %774 = vsyncpa [#allocation6], 1
    %775 = vsyncpa [#allocation4], 1
    %776 = vsyncpa [#allocation9], 1

</llo_original>
